<compile_context>
chip_gen: v5e
topology: v5e:2x2
jax: 0.10.0
libtpu: 0.0.40
codegen_flags: <defaults>
</compile_context>

<pallas_src>
import functools

import numpy as np
import jax
import jax.numpy as jnp
from jax.experimental import pallas as pl
from jax.experimental.pallas import tpu as pltpu

LANE = 128


# ----------------------------------------------------------------------------
# Single fused Pallas kernel: the entire network stays in VMEM.
# ----------------------------------------------------------------------------
def _infer_cnn_kernel(a_ref, b_ref, t1_ref, b1_ref, t2_ref, b2_ref,
                      wfc_ref, bfc_ref, o_ref, y1o_scr, *,
                      sa_input, mult1, mult2, lo, hi, nb, ho2):
    f32, bf16 = jnp.float32, jnp.bfloat16

    def mm(lhs, rhs):
        # integer-valued operands (exact in bf16), f32 MXU accumulation
        return jnp.dot(lhs.astype(bf16), rhs, preferred_element_type=f32)

    # ---- input quantization: round(clamp(x / saInput, -128, 127)) ----------
    aq = jnp.round(jnp.clip(a_ref[...] / sa_input, -128.0, 127.0))
    bq = jnp.round(jnp.clip(b_ref[...] / sa_input, -128.0, 127.0))

    # ---- conv1 (3x3, pad 1, stride 1) + raw float bias + quanAct1 ----------
    # Planes a/b hold the H-padded image rows of even/odd parity, rows ordered
    # (spatial_row, sample); kw taps + W padding are folded into t1[kh].
    r8, r9 = 8 * nb, 9 * nb
    # even conv1 output rows (0, 2, ..., 14)
    y1e = (mm(aq[0:r8], t1_ref[0]) + mm(bq[0:r8], t1_ref[1])
           + mm(aq[nb:r9], t1_ref[2]))
    # odd conv1 output rows (1, 3, ..., 15)
    y1o = (mm(bq[0:r8], t1_ref[0]) + mm(aq[nb:r9], t1_ref[1])
           + mm(bq[nb:r9], t1_ref[2]))
    # TODO(synk): exact BiasScaleQuantizer source unavailable; standard M-bit
    # fixed-point requant (clamp(round(y * mult), lo, hi)) reconstructed.
    y1e = jnp.clip(jnp.round((y1e + b1_ref[...]) * mult1), lo, hi)
    y1o = jnp.clip(jnp.round((y1o + b1_ref[...]) * mult1), lo, hi)

    # ---- conv2 (3x3, pad 1, stride 2) + raw float bias + quanAct2 ----------
    # Stash the odd-row plane behind `nb` zero rows so the kh=0 tap (which
    # touches conv2's top padding row) is a plain unit-stride slice.
    y1o_scr[0:nb, :] = jnp.zeros((nb, y1o_scr.shape[1]), f32)
    y1o_scr[nb:r9, :] = y1o
    y2 = (mm(y1o_scr[0:r8, :], t2_ref[0])        # kh=0 -> odd rows, shifted
          + mm(y1e, t2_ref[1])                   # kh=1 -> even rows
          + mm(y1o_scr[nb:r9, :], t2_ref[2]))    # kh=2 -> odd rows
    y2 = jnp.clip(jnp.round((y2 + b2_ref[...]) * mult2), lo, hi)

    # ---- fc over the flattened (oc2, ho, wo) features -----------------------
    acc = jnp.zeros((nb, wfc_ref.shape[2]), f32)
    for ho in range(ho2):                        # static, unrolled (8 blocks)
        acc = acc + mm(y2[ho * nb:(ho + 1) * nb, :], wfc_ref[ho])
    o_ref[...] = acc + bfc_ref[...]


def infer_cnn_forward(x_nchw, params):
    """x_nchw: (N, C, H, W) float32 -> logits (N, num_classes) float32."""
    (t1, b1row, t2, b2row, wfcb, bfcrow,
     sa_input, mult1, mult2, lo, hi, num_classes, ho2) = params
    n, c, h, w = x_nchw.shape
    assert h % 2 == 0, "parity-split planes assume an even input height"
    half = h // 2 + 1                  # rows per parity plane (incl. one pad row)
    ncls_pad = wfcb.shape[-1]

    # --- host-side layout plumbing (cheap XLA ops; no compute hoisted) ------
    # rows = image rows, lanes = (w, c) flatten
    x_rows = jnp.transpose(x_nchw, (0, 2, 3, 1)).reshape(n, h, w * c)
    x_rows = x_rows.astype(jnp.float32)
    zrow = jnp.zeros((n, 1, w * c), jnp.float32)
    # even / odd rows of the H-padded (pad=1) image:
    #   plane_a = x rows [-1(pad), 1, 3, ..., h-1]
    #   plane_b = x rows [0, 2, ..., h-2, h(pad)]
    plane_a = jnp.concatenate([zrow, x_rows[:, 1::2, :]], axis=1)
    plane_b = jnp.concatenate([x_rows[:, 0::2, :], zrow], axis=1)
    # rows ordered (spatial_row, sample): every in-kernel window is contiguous
    xa = plane_a.transpose(1, 0, 2).reshape(half * n, w * c)
    xb = plane_b.transpose(1, 0, 2).reshape(half * n, w * c)

    kernel = functools.partial(
        _infer_cnn_kernel, sa_input=sa_input, mult1=mult1, mult2=mult2,
        lo=lo, hi=hi, nb=n, ho2=ho2)

    def full(arr):                               # whole array as one VMEM block
        return pl.BlockSpec(arr.shape, lambda i, _nd=arr.ndim: (0,) * _nd)

    out_pad = pl.pallas_call(
        kernel,
        out_shape=jax.ShapeDtypeStruct((n, ncls_pad), jnp.float32),
        grid=(1,),
        in_specs=[full(xa), full(xb), full(t1), full(b1row), full(t2),
                  full(b2row), full(wfcb), full(bfcrow)],
        out_specs=pl.BlockSpec((n, ncls_pad), lambda i: (0, 0)),
        scratch_shapes=[pltpu.VMEM((half * n, t2.shape[1]), jnp.float32)],
        compiler_params=pltpu.CompilerParams(
            dimension_semantics=("arbitrary",)),
    )(xa, xb, t1, b1row, t2, b2row, wfcb, bfcrow)
    return out_pad[:, :num_classes]


# ----------------------------------------------------------------------------
# One-time host-side packing (model-conversion time, not in the hot path)
# ----------------------------------------------------------------------------
def width_toeplitz(w_oihw, w_in, stride, pad):
    """Fold kw taps, W-stride and W-padding of a conv into per-kh matrices.

    Returns (t, w_out) with t of shape (KH, W_in*IC, W_out*OC):
      y[h_out, wo*OC + oc] = sum_kh  x_row(h_out*stride + kh - pad) @ t[kh]
    where x_row is the (W_in*IC,) flatten (w-major, c-minor) of one input row.
    """
    oc_n, ic_n, kh_n, kw_n = w_oihw.shape
    wo_n = (w_in + 2 * pad - kw_n) // stride + 1
    t = np.zeros((kh_n, w_in * ic_n, wo_n * oc_n), np.float32)
    w_np = np.asarray(w_oihw, np.float32)
    for kh in range(kh_n):
        for wo in range(wo_n):
            for kw in range(kw_n):
                wi = wo * stride + kw - pad
                if 0 <= wi < w_in:
                    t[kh, wi * ic_n:(wi + 1) * ic_n,
                      wo * oc_n:(wo + 1) * oc_n] = w_np[:, :, kh, kw].T
    return t, wo_n


def weight_quantize(w, alpha, lo=-128.0, hi=127.0):
    """WeightQuantizer: integer-valued weights clamp(round(w / alpha))."""
    return jnp.clip(jnp.round(w / alpha), lo, hi)


def fixed_point_mult(pre_scale, weight_scale, scale, m_bits):
    # TODO(synk): exact BiasScaleQuantizer source unavailable; standard M-bit
    # fixed-point requant multiplier reconstructed here.
    return round((pre_scale * weight_scale / scale) * (2 ** m_bits)) / (2 ** m_bits)


# ----------------------------------------------------------------------------
# Pure-JAX reference (same math as the PyTorch forward) for self-check
# ----------------------------------------------------------------------------
def reference_forward(x, wq1, b1, wq2, b2, wqfc, bqfc,
                      sa_input, mult1, mult2, lo, hi):
    hp = jax.lax.Precision.HIGHEST
    xq = jnp.round(jnp.clip(x / sa_input, -128.0, 127.0))
    y1 = jax.lax.conv_general_dilated(
        xq, wq1, (1, 1), ((1, 1), (1, 1)),
        dimension_numbers=("NCHW", "OIHW", "NCHW"), precision=hp)
    y1 = y1 + b1[None, :, None, None]
    y1 = jnp.clip(jnp.round(y1 * mult1), lo, hi)
    y2 = jax.lax.conv_general_dilated(
        y1, wq2, (2, 2), ((1, 1), (1, 1)),
        dimension_numbers=("NCHW", "OIHW", "NCHW"), precision=hp)
    y2 = y2 + b2[None, :, None, None]
    y2 = jnp.clip(jnp.round(y2 * mult2), lo, hi)
    flat = y2.reshape(y2.shape[0], -1)
    return jnp.dot(flat, wqfc.T, precision=hp) + bqfc


if __name__ == "__main__":
    # ---- shapes / hyperparameters ----
    N, C, H, W = 2, 4, 16, 16
    OC1, OC2, NUM_CLASSES = 8, 8, 10
    M_BITS = 16
    LOWER, UPPER = -128.0, 127.0

    # ---- deterministic synthetic parameters (stand-in for quanCNN) ----
    key = jax.random.PRNGKey(0)
    k1, k2, k3, k4, k5, k6, kx = jax.random.split(key, 7)
    conv1_w = 0.1 * jax.random.normal(k1, (OC1, C, 3, 3), jnp.float32)
    conv1_b = 0.01 * jax.random.normal(k2, (OC1,), jnp.float32)
    conv2_w = 0.1 * jax.random.normal(k3, (OC2, OC1, 3, 3), jnp.float32)
    conv2_b = 0.01 * jax.random.normal(k4, (OC2,), jnp.float32)
    fc_in = OC2 * (H // 2) * (W // 2)                 # 8 * 8 * 8 = 512
    fc_w = 0.1 * jax.random.normal(k5, (NUM_CLASSES, fc_in), jnp.float32)
    fc_b = 0.01 * jax.random.normal(k6, (NUM_CLASSES,), jnp.float32)

    sa_input, sw1, sa1, sw2, sa2, swfc = 0.05, 0.02, 0.1, 0.03, 0.15, 0.01

    # WeightQuantizer at module-construction time (integer-valued weights).
    # Conv biases stay raw floats, FC bias is quantized — matches inferCNN.
    wq1 = weight_quantize(conv1_w, sw1, LOWER, UPPER)
    wq2 = weight_quantize(conv2_w, sw2, LOWER, UPPER)
    wqfc = weight_quantize(fc_w, swfc, LOWER, UPPER)
    bqfc = weight_quantize(fc_b, swfc * sa2, LOWER, UPPER)

    mult1 = fixed_point_mult(sa_input, sw1, sa1, M_BITS)
    mult2 = fixed_point_mult(sa1, sw2, sa2, M_BITS)

    # ---- fold W-direction of each conv into small per-kh matrices ----
    t1_np, wo1 = width_toeplitz(np.asarray(wq1), W, stride=1, pad=1)   # (3, 64, 128)
    ho1 = H                                                            # stride 1, pad 1
    t2_np, wo2 = width_toeplitz(np.asarray(wq2), wo1, stride=2, pad=1) # (3, 128, 64)
    ho2 = (ho1 + 2 - 3) // 2 + 1                                       # 8

    # Exactness guards for the bf16-operand / f32-accumulate fast path:
    # operands are integers in [-128, 128] and every partial sum < 2^24.
    assert float(jnp.max(jnp.abs(wq1))) <= 128.0
    assert float(jnp.max(jnp.abs(wq2))) <= 128.0
    assert float(jnp.max(jnp.abs(wqfc))) <= 128.0
    assert fc_in * 128.0 * 128.0 < 2 ** 24

    t1 = jnp.asarray(t1_np).astype(jnp.bfloat16)
    t2 = jnp.asarray(t2_np).astype(jnp.bfloat16)
    b1row = jnp.tile(jnp.asarray(conv1_b), wo1).reshape(1, -1)         # (1, 128) f32
    b2row = jnp.tile(jnp.asarray(conv2_b), wo2).reshape(1, -1)         # (1, 64)  f32

    # FC: columns re-ordered from torch NCHW flatten (oc, ho, wo) to the
    # kernel's (ho-block, wo, oc) activation order; class dim padded to 128
    # for a lane-dense final store (sliced back to 10 outside the kernel).
    wfc4 = np.asarray(wqfc, np.float32).reshape(NUM_CLASSES, OC2, ho2, wo2)
    wfcb_np = np.zeros((ho2, wo2 * OC2, LANE), np.float32)
    wfcb_np[..., :NUM_CLASSES] = np.transpose(wfc4, (2, 3, 1, 0)).reshape(
        ho2, wo2 * OC2, NUM_CLASSES)
    wfcb = jnp.asarray(wfcb_np).astype(jnp.bfloat16)
    bfcrow = jnp.zeros((1, LANE), jnp.float32).at[0, :NUM_CLASSES].set(bqfc)

    params = (t1, b1row, t2, b2row, wfcb, bfcrow,
              sa_input, mult1, mult2, LOWER, UPPER, NUM_CLASSES, ho2)

    # ---- run ----
    x = jax.random.normal(kx, (N, C, H, W), jnp.float32)
    out = infer_cnn_forward(x, params)
    jax.block_until_ready(out)

    # ---- correctness check against a pure-JAX reference ----
    ref = reference_forward(x, wq1, conv1_b, wq2, conv2_b, wqfc, bqfc,
                            sa_input, mult1, mult2, LOWER, UPPER)
    np.testing.assert_allclose(np.asarray(out), np.asarray(ref),
                               rtol=1e-5, atol=0.5)
    assert out.shape == (N, NUM_CLASSES) and out.dtype == jnp.float32
    print("KERNEL_OK")
</pallas_src>

<mosaic_0001>
module attributes {stable_mosaic.version = 11 : i64} {
  func.func @_infer_cnn_kernel(%arg0: i32, %arg1: memref<18x64xf32, #tpu.memory_space<vmem>>, %arg2: memref<18x64xf32, #tpu.memory_space<vmem>>, %arg3: memref<3x64x128xbf16, #tpu.memory_space<vmem>>, %arg4: memref<1x128xf32, #tpu.memory_space<vmem>>, %arg5: memref<3x128x64xbf16, #tpu.memory_space<vmem>>, %arg6: memref<1x64xf32, #tpu.memory_space<vmem>>, %arg7: memref<8x64x128xbf16, #tpu.memory_space<vmem>>, %arg8: memref<1x128xf32, #tpu.memory_space<vmem>>, %arg9: memref<2x128xf32, #tpu.memory_space<vmem>>, %arg10: memref<18x128xf32, #tpu.memory_space<vmem>>) attributes {dimension_semantics = [#tpu.dimension_semantics<arbitrary>], iteration_bounds = array<i64: 1>, scalar_prefetch = 0 : i64, scratch_operands = 1 : i64, tpu.core_type = #tpu.core_type<tc>, window_params = [{pipeline_mode = #tpu.pipeline_mode<synchronous>, transform_indices = @transform_0, window_bounds = array<i64: 18, 64>}, {pipeline_mode = #tpu.pipeline_mode<synchronous>, transform_indices = @transform_1, window_bounds = array<i64: 18, 64>}, {pipeline_mode = #tpu.pipeline_mode<synchronous>, transform_indices = @transform_2, window_bounds = array<i64: 3, 64, 128>}, {pipeline_mode = #tpu.pipeline_mode<synchronous>, transform_indices = @transform_3, window_bounds = array<i64: 1, 128>}, {pipeline_mode = #tpu.pipeline_mode<synchronous>, transform_indices = @transform_4, window_bounds = array<i64: 3, 128, 64>}, {pipeline_mode = #tpu.pipeline_mode<synchronous>, transform_indices = @transform_5, window_bounds = array<i64: 1, 64>}, {pipeline_mode = #tpu.pipeline_mode<synchronous>, transform_indices = @transform_6, window_bounds = array<i64: 8, 64, 128>}, {pipeline_mode = #tpu.pipeline_mode<synchronous>, transform_indices = @transform_7, window_bounds = array<i64: 1, 128>}, {pipeline_mode = #tpu.pipeline_mode<synchronous>, transform_indices = @transform_8, window_bounds = array<i64: 2, 128>}]} {
    %c0 = arith.constant 0 : index
    %c0_0 = arith.constant 0 : index
    %0 = vector.load %arg1[%c0, %c0_0] : memref<18x64xf32, #tpu.memory_space<vmem>>, vector<18x64xf32>
    %cst = arith.constant 5.000000e-02 : f32
    %1 = vector.broadcast %cst : f32 to vector<18x64xf32>
    %2 = arith.divf %0, %1 : vector<18x64xf32>
    %cst_1 = arith.constant -1.280000e+02 : f32
    %cst_2 = arith.constant 1.270000e+02 : f32
    %3 = vector.broadcast %cst_1 : f32 to vector<18x64xf32>
    %4 = arith.maximumf %3, %2 : vector<18x64xf32>
    %5 = vector.broadcast %cst_2 : f32 to vector<18x64xf32>
    %6 = arith.minimumf %5, %4 : vector<18x64xf32>
    %7 = math.roundeven %6 : vector<18x64xf32>
    %c0_3 = arith.constant 0 : index
    %c0_4 = arith.constant 0 : index
    %8 = vector.load %arg2[%c0_3, %c0_4] : memref<18x64xf32, #tpu.memory_space<vmem>>, vector<18x64xf32>
    %cst_5 = arith.constant 5.000000e-02 : f32
    %9 = vector.broadcast %cst_5 : f32 to vector<18x64xf32>
    %10 = arith.divf %8, %9 : vector<18x64xf32>
    %cst_6 = arith.constant -1.280000e+02 : f32
    %cst_7 = arith.constant 1.270000e+02 : f32
    %11 = vector.broadcast %cst_6 : f32 to vector<18x64xf32>
    %12 = arith.maximumf %11, %10 : vector<18x64xf32>
    %13 = vector.broadcast %cst_7 : f32 to vector<18x64xf32>
    %14 = arith.minimumf %13, %12 : vector<18x64xf32>
    %15 = math.roundeven %14 : vector<18x64xf32>
    %16 = vector.extract_strided_slice %7 {offsets = [0, 0], sizes = [16, 64], strides = [1, 1]} : vector<18x64xf32> to vector<16x64xf32>
    %c0_8 = arith.constant 0 : index
    %c0_9 = arith.constant 0 : index
    %c0_10 = arith.constant 0 : index
    %17 = vector.load %arg3[%c0_8, %c0_9, %c0_10] : memref<3x64x128xbf16, #tpu.memory_space<vmem>>, vector<1x64x128xbf16>
    %18 = vector.shape_cast %17 : vector<1x64x128xbf16> to vector<64x128xbf16>
    %19 = arith.truncf %16 : vector<16x64xf32> to vector<16x64xbf16>
    %cst_11 = arith.constant dense<0.000000e+00> : vector<16x128xf32>
    %20 = tpu.matmul %19, %18, %cst_11 {dimension_numbers = #tpu.dot_dimension_numbers<[1], [0], [0], [1], [0, 0, 1, 1], [], []>} : vector<16x64xbf16>, vector<64x128xbf16>, vector<16x128xf32> -> vector<16x128xf32>
    %21 = vector.extract_strided_slice %15 {offsets = [0, 0], sizes = [16, 64], strides = [1, 1]} : vector<18x64xf32> to vector<16x64xf32>
    %c1 = arith.constant 1 : index
    %c0_12 = arith.constant 0 : index
    %c0_13 = arith.constant 0 : index
    %22 = vector.load %arg3[%c1, %c0_12, %c0_13] : memref<3x64x128xbf16, #tpu.memory_space<vmem>>, vector<1x64x128xbf16>
    %23 = vector.shape_cast %22 : vector<1x64x128xbf16> to vector<64x128xbf16>
    %24 = arith.truncf %21 : vector<16x64xf32> to vector<16x64xbf16>
    %cst_14 = arith.constant dense<0.000000e+00> : vector<16x128xf32>
    %25 = tpu.matmul %24, %23, %cst_14 {dimension_numbers = #tpu.dot_dimension_numbers<[1], [0], [0], [1], [0, 0, 1, 1], [], []>} : vector<16x64xbf16>, vector<64x128xbf16>, vector<16x128xf32> -> vector<16x128xf32>
    %26 = arith.addf %20, %25 : vector<16x128xf32>
    %27 = vector.extract_strided_slice %7 {offsets = [2, 0], sizes = [16, 64], strides = [1, 1]} : vector<18x64xf32> to vector<16x64xf32>
    %c2 = arith.constant 2 : index
    %c0_15 = arith.constant 0 : index
    %c0_16 = arith.constant 0 : index
    %28 = vector.load %arg3[%c2, %c0_15, %c0_16] : memref<3x64x128xbf16, #tpu.memory_space<vmem>>, vector<1x64x128xbf16>
    %29 = vector.shape_cast %28 : vector<1x64x128xbf16> to vector<64x128xbf16>
    %30 = arith.truncf %27 : vector<16x64xf32> to vector<16x64xbf16>
    %cst_17 = arith.constant dense<0.000000e+00> : vector<16x128xf32>
    %31 = tpu.matmul %30, %29, %cst_17 {dimension_numbers = #tpu.dot_dimension_numbers<[1], [0], [0], [1], [0, 0, 1, 1], [], []>} : vector<16x64xbf16>, vector<64x128xbf16>, vector<16x128xf32> -> vector<16x128xf32>
    %32 = arith.addf %26, %31 : vector<16x128xf32>
    %33 = vector.extract_strided_slice %15 {offsets = [0, 0], sizes = [16, 64], strides = [1, 1]} : vector<18x64xf32> to vector<16x64xf32>
    %c0_18 = arith.constant 0 : index
    %c0_19 = arith.constant 0 : index
    %c0_20 = arith.constant 0 : index
    %34 = vector.load %arg3[%c0_18, %c0_19, %c0_20] : memref<3x64x128xbf16, #tpu.memory_space<vmem>>, vector<1x64x128xbf16>
    %35 = vector.shape_cast %34 : vector<1x64x128xbf16> to vector<64x128xbf16>
    %36 = arith.truncf %33 : vector<16x64xf32> to vector<16x64xbf16>
    %cst_21 = arith.constant dense<0.000000e+00> : vector<16x128xf32>
    %37 = tpu.matmul %36, %35, %cst_21 {dimension_numbers = #tpu.dot_dimension_numbers<[1], [0], [0], [1], [0, 0, 1, 1], [], []>} : vector<16x64xbf16>, vector<64x128xbf16>, vector<16x128xf32> -> vector<16x128xf32>
    %38 = vector.extract_strided_slice %7 {offsets = [2, 0], sizes = [16, 64], strides = [1, 1]} : vector<18x64xf32> to vector<16x64xf32>
    %c1_22 = arith.constant 1 : index
    %c0_23 = arith.constant 0 : index
    %c0_24 = arith.constant 0 : index
    %39 = vector.load %arg3[%c1_22, %c0_23, %c0_24] : memref<3x64x128xbf16, #tpu.memory_space<vmem>>, vector<1x64x128xbf16>
    %40 = vector.shape_cast %39 : vector<1x64x128xbf16> to vector<64x128xbf16>
    %41 = arith.truncf %38 : vector<16x64xf32> to vector<16x64xbf16>
    %cst_25 = arith.constant dense<0.000000e+00> : vector<16x128xf32>
    %42 = tpu.matmul %41, %40, %cst_25 {dimension_numbers = #tpu.dot_dimension_numbers<[1], [0], [0], [1], [0, 0, 1, 1], [], []>} : vector<16x64xbf16>, vector<64x128xbf16>, vector<16x128xf32> -> vector<16x128xf32>
    %43 = arith.addf %37, %42 : vector<16x128xf32>
    %44 = vector.extract_strided_slice %15 {offsets = [2, 0], sizes = [16, 64], strides = [1, 1]} : vector<18x64xf32> to vector<16x64xf32>
    %c2_26 = arith.constant 2 : index
    %c0_27 = arith.constant 0 : index
    %c0_28 = arith.constant 0 : index
    %45 = vector.load %arg3[%c2_26, %c0_27, %c0_28] : memref<3x64x128xbf16, #tpu.memory_space<vmem>>, vector<1x64x128xbf16>
    %46 = vector.shape_cast %45 : vector<1x64x128xbf16> to vector<64x128xbf16>
    %47 = arith.truncf %44 : vector<16x64xf32> to vector<16x64xbf16>
    %cst_29 = arith.constant dense<0.000000e+00> : vector<16x128xf32>
    %48 = tpu.matmul %47, %46, %cst_29 {dimension_numbers = #tpu.dot_dimension_numbers<[1], [0], [0], [1], [0, 0, 1, 1], [], []>} : vector<16x64xbf16>, vector<64x128xbf16>, vector<16x128xf32> -> vector<16x128xf32>
    %49 = arith.addf %43, %48 : vector<16x128xf32>
    %c0_30 = arith.constant 0 : index
    %c0_31 = arith.constant 0 : index
    %50 = vector.load %arg4[%c0_30, %c0_31] : memref<1x128xf32, #tpu.memory_space<vmem>>, vector<1x128xf32>
    %51 = vector.broadcast %50 : vector<1x128xf32> to vector<16x128xf32>
    %52 = arith.addf %32, %51 : vector<16x128xf32>
    %cst_32 = arith.constant 0.00999450683 : f32
    %53 = vector.broadcast %cst_32 : f32 to vector<16x128xf32>
    %54 = arith.mulf %52, %53 : vector<16x128xf32>
    %55 = math.roundeven %54 : vector<16x128xf32>
    %cst_33 = arith.constant -1.280000e+02 : f32
    %cst_34 = arith.constant 1.270000e+02 : f32
    %56 = vector.broadcast %cst_33 : f32 to vector<16x128xf32>
    %57 = arith.maximumf %56, %55 : vector<16x128xf32>
    %58 = vector.broadcast %cst_34 : f32 to vector<16x128xf32>
    %59 = arith.minimumf %58, %57 : vector<16x128xf32>
    %c0_35 = arith.constant 0 : index
    %c0_36 = arith.constant 0 : index
    %60 = vector.load %arg4[%c0_35, %c0_36] : memref<1x128xf32, #tpu.memory_space<vmem>>, vector<1x128xf32>
    %61 = vector.broadcast %60 : vector<1x128xf32> to vector<16x128xf32>
    %62 = arith.addf %49, %61 : vector<16x128xf32>
    %cst_37 = arith.constant 0.00999450683 : f32
    %63 = vector.broadcast %cst_37 : f32 to vector<16x128xf32>
    %64 = arith.mulf %62, %63 : vector<16x128xf32>
    %65 = math.roundeven %64 : vector<16x128xf32>
    %cst_38 = arith.constant -1.280000e+02 : f32
    %cst_39 = arith.constant 1.270000e+02 : f32
    %66 = vector.broadcast %cst_38 : f32 to vector<16x128xf32>
    %67 = arith.maximumf %66, %65 : vector<16x128xf32>
    %68 = vector.broadcast %cst_39 : f32 to vector<16x128xf32>
    %69 = arith.minimumf %68, %67 : vector<16x128xf32>
    %cst_40 = arith.constant 0.000000e+00 : f32
    %70 = vector.broadcast %cst_40 : f32 to vector<2x128xf32>
    %c0_41 = arith.constant 0 : index
    %c0_42 = arith.constant 0 : index
    %71 = vector.load %arg10[%c0_41, %c0_42] : memref<18x128xf32, #tpu.memory_space<vmem>>, vector<2x128xf32>
    tpu.vector_store %arg10[%c0_41, %c0_42], %70 {strides = array<i32>} : memref<18x128xf32, #tpu.memory_space<vmem>>, vector<2x128xf32>,
    %c2_43 = arith.constant 2 : index
    %c0_44 = arith.constant 0 : index
    %72 = vector.load %arg10[%c2_43, %c0_44] : memref<18x128xf32, #tpu.memory_space<vmem>>, vector<16x128xf32>
    tpu.vector_store %arg10[%c2_43, %c0_44], %69 {strides = array<i32>} : memref<18x128xf32, #tpu.memory_space<vmem>>, vector<16x128xf32>,
    %c0_45 = arith.constant 0 : index
    %c0_46 = arith.constant 0 : index
    %73 = vector.load %arg10[%c0_45, %c0_46] : memref<18x128xf32, #tpu.memory_space<vmem>>, vector<16x128xf32>
    %c0_47 = arith.constant 0 : index
    %c0_48 = arith.constant 0 : index
    %c0_49 = arith.constant 0 : index
    %74 = vector.load %arg5[%c0_47, %c0_48, %c0_49] : memref<3x128x64xbf16, #tpu.memory_space<vmem>>, vector<1x128x64xbf16>
    %75 = vector.shape_cast %74 : vector<1x128x64xbf16> to vector<128x64xbf16>
    %76 = arith.truncf %73 : vector<16x128xf32> to vector<16x128xbf16>
    %cst_50 = arith.constant dense<0.000000e+00> : vector<16x64xf32>
    %77 = tpu.matmul %76, %75, %cst_50 {dimension_numbers = #tpu.dot_dimension_numbers<[1], [0], [0], [1], [0, 0, 1, 1], [], []>} : vector<16x128xbf16>, vector<128x64xbf16>, vector<16x64xf32> -> vector<16x64xf32>
    %c1_51 = arith.constant 1 : index
    %c0_52 = arith.constant 0 : index
    %c0_53 = arith.constant 0 : index
    %78 = vector.load %arg5[%c1_51, %c0_52, %c0_53] : memref<3x128x64xbf16, #tpu.memory_space<vmem>>, vector<1x128x64xbf16>
    %79 = vector.shape_cast %78 : vector<1x128x64xbf16> to vector<128x64xbf16>
    %80 = arith.truncf %59 : vector<16x128xf32> to vector<16x128xbf16>
    %cst_54 = arith.constant dense<0.000000e+00> : vector<16x64xf32>
    %81 = tpu.matmul %80, %79, %cst_54 {dimension_numbers = #tpu.dot_dimension_numbers<[1], [0], [0], [1], [0, 0, 1, 1], [], []>} : vector<16x128xbf16>, vector<128x64xbf16>, vector<16x64xf32> -> vector<16x64xf32>
    %82 = arith.addf %77, %81 : vector<16x64xf32>
    %c2_55 = arith.constant 2 : index
    %c0_56 = arith.constant 0 : index
    %83 = vector.load %arg10[%c2_55, %c0_56] : memref<18x128xf32, #tpu.memory_space<vmem>>, vector<16x128xf32>
    %c2_57 = arith.constant 2 : index
    %c0_58 = arith.constant 0 : index
    %c0_59 = arith.constant 0 : index
    %84 = vector.load %arg5[%c2_57, %c0_58, %c0_59] : memref<3x128x64xbf16, #tpu.memory_space<vmem>>, vector<1x128x64xbf16>
    %85 = vector.shape_cast %84 : vector<1x128x64xbf16> to vector<128x64xbf16>
    %86 = arith.truncf %83 : vector<16x128xf32> to vector<16x128xbf16>
    %cst_60 = arith.constant dense<0.000000e+00> : vector<16x64xf32>
    %87 = tpu.matmul %86, %85, %cst_60 {dimension_numbers = #tpu.dot_dimension_numbers<[1], [0], [0], [1], [0, 0, 1, 1], [], []>} : vector<16x128xbf16>, vector<128x64xbf16>, vector<16x64xf32> -> vector<16x64xf32>
    %88 = arith.addf %82, %87 : vector<16x64xf32>
    %c0_61 = arith.constant 0 : index
    %c0_62 = arith.constant 0 : index
    %89 = vector.load %arg6[%c0_61, %c0_62] : memref<1x64xf32, #tpu.memory_space<vmem>>, vector<1x64xf32>
    %90 = vector.broadcast %89 : vector<1x64xf32> to vector<16x64xf32>
    %91 = arith.addf %88, %90 : vector<16x64xf32>
    %cst_63 = arith.constant 0.0200042725 : f32
    %92 = vector.broadcast %cst_63 : f32 to vector<16x64xf32>
    %93 = arith.mulf %91, %92 : vector<16x64xf32>
    %94 = math.roundeven %93 : vector<16x64xf32>
    %cst_64 = arith.constant -1.280000e+02 : f32
    %cst_65 = arith.constant 1.270000e+02 : f32
    %95 = vector.broadcast %cst_64 : f32 to vector<16x64xf32>
    %96 = arith.maximumf %95, %94 : vector<16x64xf32>
    %97 = vector.broadcast %cst_65 : f32 to vector<16x64xf32>
    %98 = arith.minimumf %97, %96 : vector<16x64xf32>
    %cst_66 = arith.constant 0.000000e+00 : f32
    %99 = vector.broadcast %cst_66 : f32 to vector<2x128xf32>
    %100 = vector.extract_strided_slice %98 {offsets = [0, 0], sizes = [2, 64], strides = [1, 1]} : vector<16x64xf32> to vector<2x64xf32>
    %c0_67 = arith.constant 0 : index
    %c0_68 = arith.constant 0 : index
    %c0_69 = arith.constant 0 : index
    %101 = vector.load %arg7[%c0_67, %c0_68, %c0_69] : memref<8x64x128xbf16, #tpu.memory_space<vmem>>, vector<1x64x128xbf16>
    %102 = vector.shape_cast %101 : vector<1x64x128xbf16> to vector<64x128xbf16>
    %103 = arith.truncf %100 : vector<2x64xf32> to vector<2x64xbf16>
    %cst_70 = arith.constant dense<0.000000e+00> : vector<2x128xf32>
    %104 = tpu.matmul %103, %102, %cst_70 {dimension_numbers = #tpu.dot_dimension_numbers<[1], [0], [0], [1], [0, 0, 1, 1], [], []>} : vector<2x64xbf16>, vector<64x128xbf16>, vector<2x128xf32> -> vector<2x128xf32>
    %105 = arith.addf %99, %104 : vector<2x128xf32>
    %106 = vector.extract_strided_slice %98 {offsets = [2, 0], sizes = [2, 64], strides = [1, 1]} : vector<16x64xf32> to vector<2x64xf32>
    %c1_71 = arith.constant 1 : index
    %c0_72 = arith.constant 0 : index
    %c0_73 = arith.constant 0 : index
    %107 = vector.load %arg7[%c1_71, %c0_72, %c0_73] : memref<8x64x128xbf16, #tpu.memory_space<vmem>>, vector<1x64x128xbf16>
    %108 = vector.shape_cast %107 : vector<1x64x128xbf16> to vector<64x128xbf16>
    %109 = arith.truncf %106 : vector<2x64xf32> to vector<2x64xbf16>
    %cst_74 = arith.constant dense<0.000000e+00> : vector<2x128xf32>
    %110 = tpu.matmul %109, %108, %cst_74 {dimension_numbers = #tpu.dot_dimension_numbers<[1], [0], [0], [1], [0, 0, 1, 1], [], []>} : vector<2x64xbf16>, vector<64x128xbf16>, vector<2x128xf32> -> vector<2x128xf32>
    %111 = arith.addf %105, %110 : vector<2x128xf32>
    %112 = vector.extract_strided_slice %98 {offsets = [4, 0], sizes = [2, 64], strides = [1, 1]} : vector<16x64xf32> to vector<2x64xf32>
    %c2_75 = arith.constant 2 : index
    %c0_76 = arith.constant 0 : index
    %c0_77 = arith.constant 0 : index
    %113 = vector.load %arg7[%c2_75, %c0_76, %c0_77] : memref<8x64x128xbf16, #tpu.memory_space<vmem>>, vector<1x64x128xbf16>
    %114 = vector.shape_cast %113 : vector<1x64x128xbf16> to vector<64x128xbf16>
    %115 = arith.truncf %112 : vector<2x64xf32> to vector<2x64xbf16>
    %cst_78 = arith.constant dense<0.000000e+00> : vector<2x128xf32>
    %116 = tpu.matmul %115, %114, %cst_78 {dimension_numbers = #tpu.dot_dimension_numbers<[1], [0], [0], [1], [0, 0, 1, 1], [], []>} : vector<2x64xbf16>, vector<64x128xbf16>, vector<2x128xf32> -> vector<2x128xf32>
    %117 = arith.addf %111, %116 : vector<2x128xf32>
    %118 = vector.extract_strided_slice %98 {offsets = [6, 0], sizes = [2, 64], strides = [1, 1]} : vector<16x64xf32> to vector<2x64xf32>
    %c3 = arith.constant 3 : index
    %c0_79 = arith.constant 0 : index
    %c0_80 = arith.constant 0 : index
    %119 = vector.load %arg7[%c3, %c0_79, %c0_80] : memref<8x64x128xbf16, #tpu.memory_space<vmem>>, vector<1x64x128xbf16>
    %120 = vector.shape_cast %119 : vector<1x64x128xbf16> to vector<64x128xbf16>
    %121 = arith.truncf %118 : vector<2x64xf32> to vector<2x64xbf16>
    %cst_81 = arith.constant dense<0.000000e+00> : vector<2x128xf32>
    %122 = tpu.matmul %121, %120, %cst_81 {dimension_numbers = #tpu.dot_dimension_numbers<[1], [0], [0], [1], [0, 0, 1, 1], [], []>} : vector<2x64xbf16>, vector<64x128xbf16>, vector<2x128xf32> -> vector<2x128xf32>
    %123 = arith.addf %117, %122 : vector<2x128xf32>
    %124 = vector.extract_strided_slice %98 {offsets = [8, 0], sizes = [2, 64], strides = [1, 1]} : vector<16x64xf32> to vector<2x64xf32>
    %c4 = arith.constant 4 : index
    %c0_82 = arith.constant 0 : index
    %c0_83 = arith.constant 0 : index
    %125 = vector.load %arg7[%c4, %c0_82, %c0_83] : memref<8x64x128xbf16, #tpu.memory_space<vmem>>, vector<1x64x128xbf16>
    %126 = vector.shape_cast %125 : vector<1x64x128xbf16> to vector<64x128xbf16>
    %127 = arith.truncf %124 : vector<2x64xf32> to vector<2x64xbf16>
    %cst_84 = arith.constant dense<0.000000e+00> : vector<2x128xf32>
    %128 = tpu.matmul %127, %126, %cst_84 {dimension_numbers = #tpu.dot_dimension_numbers<[1], [0], [0], [1], [0, 0, 1, 1], [], []>} : vector<2x64xbf16>, vector<64x128xbf16>, vector<2x128xf32> -> vector<2x128xf32>
    %129 = arith.addf %123, %128 : vector<2x128xf32>
    %130 = vector.extract_strided_slice %98 {offsets = [10, 0], sizes = [2, 64], strides = [1, 1]} : vector<16x64xf32> to vector<2x64xf32>
    %c5 = arith.constant 5 : index
    %c0_85 = arith.constant 0 : index
    %c0_86 = arith.constant 0 : index
    %131 = vector.load %arg7[%c5, %c0_85, %c0_86] : memref<8x64x128xbf16, #tpu.memory_space<vmem>>, vector<1x64x128xbf16>
    %132 = vector.shape_cast %131 : vector<1x64x128xbf16> to vector<64x128xbf16>
    %133 = arith.truncf %130 : vector<2x64xf32> to vector<2x64xbf16>
    %cst_87 = arith.constant dense<0.000000e+00> : vector<2x128xf32>
    %134 = tpu.matmul %133, %132, %cst_87 {dimension_numbers = #tpu.dot_dimension_numbers<[1], [0], [0], [1], [0, 0, 1, 1], [], []>} : vector<2x64xbf16>, vector<64x128xbf16>, vector<2x128xf32> -> vector<2x128xf32>
    %135 = arith.addf %129, %134 : vector<2x128xf32>
    %136 = vector.extract_strided_slice %98 {offsets = [12, 0], sizes = [2, 64], strides = [1, 1]} : vector<16x64xf32> to vector<2x64xf32>
    %c6 = arith.constant 6 : index
    %c0_88 = arith.constant 0 : index
    %c0_89 = arith.constant 0 : index
    %137 = vector.load %arg7[%c6, %c0_88, %c0_89] : memref<8x64x128xbf16, #tpu.memory_space<vmem>>, vector<1x64x128xbf16>
    %138 = vector.shape_cast %137 : vector<1x64x128xbf16> to vector<64x128xbf16>
    %139 = arith.truncf %136 : vector<2x64xf32> to vector<2x64xbf16>
    %cst_90 = arith.constant dense<0.000000e+00> : vector<2x128xf32>
    %140 = tpu.matmul %139, %138, %cst_90 {dimension_numbers = #tpu.dot_dimension_numbers<[1], [0], [0], [1], [0, 0, 1, 1], [], []>} : vector<2x64xbf16>, vector<64x128xbf16>, vector<2x128xf32> -> vector<2x128xf32>
    %141 = arith.addf %135, %140 : vector<2x128xf32>
    %142 = vector.extract_strided_slice %98 {offsets = [14, 0], sizes = [2, 64], strides = [1, 1]} : vector<16x64xf32> to vector<2x64xf32>
    %c7 = arith.constant 7 : index
    %c0_91 = arith.constant 0 : index
    %c0_92 = arith.constant 0 : index
    %143 = vector.load %arg7[%c7, %c0_91, %c0_92] : memref<8x64x128xbf16, #tpu.memory_space<vmem>>, vector<1x64x128xbf16>
    %144 = vector.shape_cast %143 : vector<1x64x128xbf16> to vector<64x128xbf16>
    %145 = arith.truncf %142 : vector<2x64xf32> to vector<2x64xbf16>
    %cst_93 = arith.constant dense<0.000000e+00> : vector<2x128xf32>
    %146 = tpu.matmul %145, %144, %cst_93 {dimension_numbers = #tpu.dot_dimension_numbers<[1], [0], [0], [1], [0, 0, 1, 1], [], []>} : vector<2x64xbf16>, vector<64x128xbf16>, vector<2x128xf32> -> vector<2x128xf32>
    %147 = arith.addf %141, %146 : vector<2x128xf32>
    %c0_94 = arith.constant 0 : index
    %c0_95 = arith.constant 0 : index
    %148 = vector.load %arg8[%c0_94, %c0_95] : memref<1x128xf32, #tpu.memory_space<vmem>>, vector<1x128xf32>
    %149 = vector.broadcast %148 : vector<1x128xf32> to vector<2x128xf32>
    %150 = arith.addf %147, %149 : vector<2x128xf32>
    %c0_96 = arith.constant 0 : index
    %c0_97 = arith.constant 0 : index
    %151 = vector.load %arg9[%c0_96, %c0_97] : memref<2x128xf32, #tpu.memory_space<vmem>>, vector<2x128xf32>
    tpu.vector_store %arg9[%c0_96, %c0_97], %150 {strides = array<i32>} : memref<2x128xf32, #tpu.memory_space<vmem>>, vector<2x128xf32>,
    return
  }
  func.func @transform_0(%arg0: i32) -> (i32, i32) {
    %c0_i32 = arith.constant 0 : i32
    %c0_i32_0 = arith.constant 0 : i32
    %c0_i32_1 = arith.constant 0 : i32
    return %c0_i32, %c0_i32_0 : i32, i32
  }
  func.func @transform_1(%arg0: i32) -> (i32, i32) {
    %c0_i32 = arith.constant 0 : i32
    %c0_i32_0 = arith.constant 0 : i32
    %c0_i32_1 = arith.constant 0 : i32
    return %c0_i32, %c0_i32_0 : i32, i32
  }
  func.func @transform_2(%arg0: i32) -> (i32, i32, i32) {
    %c0_i32 = arith.constant 0 : i32
    %c0_i32_0 = arith.constant 0 : i32
    %c0_i32_1 = arith.constant 0 : i32
    %c0_i32_2 = arith.constant 0 : i32
    return %c0_i32, %c0_i32_0, %c0_i32_1 : i32, i32, i32
  }
  func.func @transform_3(%arg0: i32) -> (i32, i32) {
    %c0_i32 = arith.constant 0 : i32
    %c0_i32_0 = arith.constant 0 : i32
    %c0_i32_1 = arith.constant 0 : i32
    return %c0_i32, %c0_i32_0 : i32, i32
  }
  func.func @transform_4(%arg0: i32) -> (i32, i32, i32) {
    %c0_i32 = arith.constant 0 : i32
    %c0_i32_0 = arith.constant 0 : i32
    %c0_i32_1 = arith.constant 0 : i32
    %c0_i32_2 = arith.constant 0 : i32
    return %c0_i32, %c0_i32_0, %c0_i32_1 : i32, i32, i32
  }
  func.func @transform_5(%arg0: i32) -> (i32, i32) {
    %c0_i32 = arith.constant 0 : i32
    %c0_i32_0 = arith.constant 0 : i32
    %c0_i32_1 = arith.constant 0 : i32
    return %c0_i32, %c0_i32_0 : i32, i32
  }
  func.func @transform_6(%arg0: i32) -> (i32, i32, i32) {
    %c0_i32 = arith.constant 0 : i32
    %c0_i32_0 = arith.constant 0 : i32
    %c0_i32_1 = arith.constant 0 : i32
    %c0_i32_2 = arith.constant 0 : i32
    return %c0_i32, %c0_i32_0, %c0_i32_1 : i32, i32, i32
  }
  func.func @transform_7(%arg0: i32) -> (i32, i32) {
    %c0_i32 = arith.constant 0 : i32
    %c0_i32_0 = arith.constant 0 : i32
    %c0_i32_1 = arith.constant 0 : i32
    return %c0_i32, %c0_i32_0 : i32, i32
  }
  func.func @transform_8(%arg0: i32) -> (i32, i32) {
    %c0_i32 = arith.constant 0 : i32
    %c0_i32_0 = arith.constant 0 : i32
    %c0_i32_1 = arith.constant 0 : i32
    return %c0_i32, %c0_i32_0 : i32, i32
  }
}

</mosaic_0001>

<llo_original>
// kernel: tpu_custom_call.1
$region0: #{tpu_custom_call.1}
  #allocation0 [shape = 'u32[]', space=smem, size = 0x4, offset = 0x4, fixed_abs, tag = 'smem constant byte address 0x4 - core index']
  #allocation1 [shape = 'u32[72,128]{1,0:T(1,128)}', space=vmem, size = 0x9000, scoped, tag = 'internal scratch']
  #allocation2 [shape = 'f32[18,128]{1,0:T(8,128)}', space=vmem, size = 0x3000, scoped, tag = 'scratch operand']
  %s0 = inlined_call_operand.vmem [shape: f32[18,64], index: 0, kind: input, shape index: {}]
  %s1 = inlined_call_operand.hbm [shape: f32[18,64], index: 1, kind: input, shape index: {}]
  %s2 = inlined_call_operand.hbm [shape: bf16[3,64,128], index: 2, kind: input, shape index: {}]
  %s3 = inlined_call_operand.vmem [shape: f32[1,128], index: 3, kind: input, shape index: {}]
  %s4 = inlined_call_operand.vmem [shape: bf16[3,128,64], index: 4, kind: input, shape index: {}]
  %s5 = inlined_call_operand.vmem [shape: f32[1,64], index: 5, kind: input, shape index: {}]
  %s6 = inlined_call_operand.vmem [shape: bf16[8,64,128], index: 6, kind: input, shape index: {}]
  %s7 = inlined_call_operand.vmem [shape: f32[1,128], index: 7, kind: input, shape index: {}]
  %s8 = inlined_call_operand.hbm [shape: f32[2,128], index: 8, kind: output, shape index: {}]
  %s9 = sld [smem:[#allocation0]]
  $region50: #{tpu_custom_call.1} parent=0
    _
  %s11 = ssub.s32 1, %s9
  %s12 = scalar_select 0, %s11, %s9
  $region1: #{tpu_custom_call.1} parent=0
    #allocation3 [shape = 'u8[12288]{0}', space=vmem, size = 0x3000, scoped, tag = 'input window, operand 1, single buffered']
    #allocation4 [shape = 's32[1]{0}', space=sflag, size = 0x4, scoped, tag = 'scoped memory for tpu_custom_call.1']
    #allocation5 [shape = 's32[1]{0}', space=sflag, size = 0x4, scoped, tag = 'scoped memory for tpu_custom_call.1']
    #allocation6 [shape = 'u8[49152]{0}', space=vmem, size = 0xc000, scoped, tag = 'input window, operand 2, single buffered']
    #allocation7 [shape = 's32[1]{0}', space=sflag, size = 0x4, scoped, tag = 'scoped memory for tpu_custom_call.1']
    #allocation8 [shape = 'u8[1024]{0}', space=vmem, size = 0x400, scoped, tag = 'output window, operand 0, single buffered']
    %13 = vsyncpa [#allocation4], 0
    %14 = vsyncpa [#allocation7], 0
    %15 = vsyncpa [#allocation5], 0
    // Predicated region
    $region2: #{tpu_custom_call.1} parent=1 // pred_check
      _
    $region3: #{tpu_custom_call.1} parent=1 // pred_check_branch
      %17 = sbr.rel (0) target = $region5
    $region4: #{tpu_custom_call.1} parent=1 // pred_region
      _
    $region5: #{tpu_custom_call.1} parent=1 // pred_fallthru
      _
    // Predicated region
    $region6: #{tpu_custom_call.1} parent=1 // pred_check
      _
    $region7: #{tpu_custom_call.1} parent=1 // pred_check_branch
      %19 = sbr.rel (0) target = $region9
    $region8: #{tpu_custom_call.1} parent=1 // pred_region
      %21 = vsyncadd [#allocation4], 0
      %s22 = sshll.u32 %s1, 4
      %s23 = int_to_ptr.hbm [resolvable:$true] %s22
      %s24 = sshll.u32 [#allocation3], 4
      %s25 = int_to_ptr.vmem [resolvable:$true] %s24
      %30 = dma.hbm_to_vmem [thread:$0]  %s23, 384, %s25, [#allocation4], 128, 128, 8
    $region9: #{tpu_custom_call.1} parent=1 // pred_fallthru
      _
    // Predicated region
    $region10: #{tpu_custom_call.1} parent=1 // pred_check
      _
    $region11: #{tpu_custom_call.1} parent=1 // pred_check_branch
      %32 = sbr.rel (0) target = $region13
    $region12: #{tpu_custom_call.1} parent=1 // pred_region
      %34 = vsyncadd [#allocation7], 0
      %s35 = sshll.u32 %s2, 4
      %s36 = int_to_ptr.hbm [resolvable:$true] %s35
      %s37 = sshll.u32 [#allocation6], 4
      %s38 = int_to_ptr.vmem [resolvable:$true] %s37
      %43 = dma.hbm_to_vmem [thread:$0]  %s36, 1536, %s38, [#allocation7], 64, 64, 4
    $region13: #{tpu_custom_call.1} parent=1 // pred_fallthru
      _
    // Predicated region
    $region14: #{tpu_custom_call.1} parent=1 // pred_check
      _
    $region15: #{tpu_custom_call.1} parent=1 // pred_check_branch
      %45 = sbr.rel (0) target = $region17
    $region16: #{tpu_custom_call.1} parent=1 // pred_region
      _
    $region17: #{tpu_custom_call.1} parent=1 // pred_fallthru
      _
    // Predicated region
    $region18: #{tpu_custom_call.1} parent=1 // pred_check
      _
    $region19: #{tpu_custom_call.1} parent=1 // pred_check_branch
      %47 = sbr.rel (0) target = $region21
    $region20: #{tpu_custom_call.1} parent=1 // pred_region
      _
    $region21: #{tpu_custom_call.1} parent=1 // pred_fallthru
      _
    // Predicated region
    $region22: #{tpu_custom_call.1} parent=1 // pred_check
      _
    $region23: #{tpu_custom_call.1} parent=1 // pred_check_branch
      %49 = sbr.rel (0) target = $region25
    $region24: #{tpu_custom_call.1} parent=1 // pred_region
      _
    $region25: #{tpu_custom_call.1} parent=1 // pred_fallthru
      _
    // Predicated region
    $region26: #{tpu_custom_call.1} parent=1 // pred_check
      _
    $region27: #{tpu_custom_call.1} parent=1 // pred_check_branch
      %51 = sbr.rel (0) target = $region29
    $region28: #{tpu_custom_call.1} parent=1 // pred_region
      _
    $region29: #{tpu_custom_call.1} parent=1 // pred_fallthru
      _
    // Predicated region
    $region30: #{tpu_custom_call.1} parent=1 // pred_check
      _
    $region31: #{tpu_custom_call.1} parent=1 // pred_check_branch
      %53 = sbr.rel (0) target = $region33
    $region32: #{tpu_custom_call.1} parent=1 // pred_region
      _
    $region33: #{tpu_custom_call.1} parent=1 // pred_fallthru
      _
    // Predicated region
    $region34: #{tpu_custom_call.1} parent=1 // pred_check
      _
    $region35: #{tpu_custom_call.1} parent=1 // pred_check_branch
      %55 = sbr.rel (0) target = $region37
    $region36: #{tpu_custom_call.1} parent=1 // pred_region
      %57 = dma.done [#allocation4], 384
    $region37: #{tpu_custom_call.1} parent=1 // pred_fallthru
      _
    // Predicated region
    $region38: #{tpu_custom_call.1} parent=1 // pred_check
      _
    $region39: #{tpu_custom_call.1} parent=1 // pred_check_branch
      %59 = sbr.rel (0) target = $region41
    $region40: #{tpu_custom_call.1} parent=1 // pred_region
      %61 = dma.done [#allocation7], 1536
    $region41: #{tpu_custom_call.1} parent=1 // pred_fallthru
      _
    %v63 = vld [vmem:[%s0] sm:$0xff]
    %v64 = vld [vmem:[%s0 + $0x8] sm:$0xff]
    %v65 = vld [vmem:[%s0 + $0x10] sm:$0x3]
    %v66 = vrcp.pop 0.05
    %v67 = vmul.f32 0.05, %v66
    %v68 = vsub.f32 1.0, %v67
    %v69 = vmul.f32 %v66, %v68
    %v70 = vadd.f32 %v66, %v69
    %vm71 = vweird.f32 %v66
    %v72 = vsel %vm71, %v66, %v70
    %v73 = vmul.f32 %v63, %v72
    %v74 = vmul.f32 %v64, %v72
    %v75 = vmul.f32 %v65, %v72
    %v76 = vmax.f32 %v73, -128.0
    %v77 = vmax.f32 %v74, -128.0
    %v78 = vmax.f32 %v75, -128.0
    %v79 = vmin.f32 %v76, 127.0
    %v80 = vmin.f32 %v77, 127.0
    %v81 = vmin.f32 %v78, 127.0
    %v82 = vround.ne.pseudo %v79
    %v83 = vround.ne.pseudo %v80
    %v84 = vround.ne.pseudo %v81
    %v85 = vld [vmem:[#allocation3] sm:$0xff]
    %v86 = vld [vmem:[#allocation3 + $0x8] sm:$0xff]
    %v87 = vld [vmem:[#allocation3 + $0x10] sm:$0x3]
    %v88 = vmul.f32 %v85, %v72
    %v89 = vmul.f32 %v86, %v72
    %v90 = vmul.f32 %v87, %v72
    %v91 = vmax.f32 %v88, -128.0
    %v92 = vmax.f32 %v89, -128.0
    %v93 = vmax.f32 %v90, -128.0
    %v94 = vmin.f32 %v91, 127.0
    %v95 = vmin.f32 %v92, 127.0
    %v96 = vmin.f32 %v93, 127.0
    %v97 = vround.ne.pseudo %v94
    %v98 = vround.ne.pseudo %v95
    %v99 = vround.ne.pseudo %v96
    %v100 = vld [vmem:[#allocation6] sm:$0xf]
    %v101 = vld [vmem:[#allocation6 + $0x4] sm:$0xf]
    %v102 = vld [vmem:[#allocation6 + $0x8] sm:$0xf]
    %v103 = vld [vmem:[#allocation6 + $0xc] sm:$0xf]
    %v104 = vld [vmem:[#allocation6 + $0x10] sm:$0xf]
    %v105 = vld [vmem:[#allocation6 + $0x14] sm:$0xf]
    %v106 = vld [vmem:[#allocation6 + $0x18] sm:$0xf]
    %v107 = vld [vmem:[#allocation6 + $0x1c] sm:$0xf]
    %v108 = vpack.c.bf16 %v83, %v82
    %s109 = scalar_lea.vmem [#allocation6], 32
    %v110 = vld [vmem:[%s109] sm:$0xf]
    %v111 = vld [vmem:[%s109 + $0x4] sm:$0xf]
    %v112 = vld [vmem:[%s109 + $0x8] sm:$0xf]
    %v113 = vld [vmem:[%s109 + $0xc] sm:$0xf]
    %v114 = vld [vmem:[%s109 + $0x10] sm:$0xf]
    %v115 = vld [vmem:[%s109 + $0x14] sm:$0xf]
    %v116 = vld [vmem:[%s109 + $0x18] sm:$0xf]
    %v117 = vld [vmem:[%s109 + $0x1c] sm:$0xf]
    %v118 = vpack.c.bf16 %v98, %v97
    %v127 = vunpack.c.l.b16 %v110
    %v128 = vunpack.c.l.b16 %v111
    %v129 = vunpack.c.l.b16 %v112
    %v130 = vunpack.c.l.b16 %v113
    %v131 = vunpack.c.l.b16 %v114
    %v132 = vunpack.c.l.b16 %v115
    %v133 = vunpack.c.l.b16 %v116
    %v134 = vunpack.c.l.b16 %v117
    %v135 = vpack.c.b16 %v128, %v127
    %v136 = vpack.c.b16 %v130, %v129
    %v137 = vpack.c.b16 %v132, %v131
    %v138 = vpack.c.b16 %v134, %v133
    %vm143 = vcmask 523264
    %v145 = vsel %vm143, %v118, 0
    %147 = vmatpush.bf16.msra.mxu0 0
    %148 = vmatpush.bf16.msra.mxu0 0
    %149 = vmatpush.bf16.msra.mxu0 0
    %150 = vmatpush.bf16.msra.mxu0 0
    %151 = vmatpush.bf16.msra.mxu0 %v138
    %152 = vmatpush.bf16.msra.mxu0 %v137
    %153 = vmatpush.bf16.msra.mxu0 %v136
    %154 = vmatpush.bf16.msra.mxu0 %v135
    %155 = vmatmul.bf16.gmra.mxu0 %v145
    %v156 = vpop.f32.mrf.mxu0
    %v157 = vadd.f32 0.0, %v156
    %v158 = vpop.f32.mrf.mxu0
    %v159 = vadd.f32 0.0, %v158
    %160 = vdwg.mxu0
    %v169 = vunpack.c.l.b16 %v100
    %v170 = vunpack.c.l.b16 %v101
    %v171 = vunpack.c.l.b16 %v102
    %v172 = vunpack.c.l.b16 %v103
    %v173 = vunpack.c.l.b16 %v104
    %v174 = vunpack.c.l.b16 %v105
    %v175 = vunpack.c.l.b16 %v106
    %v176 = vunpack.c.l.b16 %v107
    %v177 = vpack.c.b16 %v170, %v169
    %v178 = vpack.c.b16 %v172, %v171
    %v179 = vpack.c.b16 %v174, %v173
    %v180 = vpack.c.b16 %v176, %v175
    %v186 = vsel %vm143, %v108, 0
    %188 = vmatpush.bf16.msra.mxu0 0
    %189 = vmatpush.bf16.msra.mxu0 0
    %190 = vmatpush.bf16.msra.mxu0 0
    %191 = vmatpush.bf16.msra.mxu0 0
    %192 = vmatpush.bf16.msra.mxu0 %v180
    %193 = vmatpush.bf16.msra.mxu0 %v179
    %194 = vmatpush.bf16.msra.mxu0 %v178
    %195 = vmatpush.bf16.msra.mxu0 %v177
    %196 = vmatmul.bf16.gmra.mxu0 %v186
    %v197 = vpop.f32.mrf.mxu0
    %v198 = vadd.f32 %v157, %v197
    %v199 = vpop.f32.mrf.mxu0
    %v200 = vadd.f32 %v159, %v199
    %201 = vdwg.mxu0
    %s202 = scalar_lea.vmem [#allocation6], 64
    %v203 = vld [vmem:[%s202] sm:$0xf]
    %v204 = vld [vmem:[%s202 + $0x4] sm:$0xf]
    %v205 = vld [vmem:[%s202 + $0x8] sm:$0xf]
    %v206 = vld [vmem:[%s202 + $0xc] sm:$0xf]
    %v207 = vld [vmem:[%s202 + $0x10] sm:$0xf]
    %v208 = vld [vmem:[%s202 + $0x14] sm:$0xf]
    %v209 = vld [vmem:[%s202 + $0x18] sm:$0xf]
    %v210 = vld [vmem:[%s202 + $0x1c] sm:$0xf]
    %v211 = vpack.c.bf16 %v84, %v84
    %vm214 = vcmask 1046528
    %v215 = vrot.slane %v108, 1
    %v216 = vrot.slane %v211, 1
    %v217 = vsel %vm214, %v215, %v216
    %v226 = vunpack.c.l.b16 %v203
    %v227 = vunpack.c.l.b16 %v204
    %v228 = vunpack.c.l.b16 %v205
    %v229 = vunpack.c.l.b16 %v206
    %v230 = vunpack.c.l.b16 %v207
    %v231 = vunpack.c.l.b16 %v208
    %v232 = vunpack.c.l.b16 %v209
    %v233 = vunpack.c.l.b16 %v210
    %v234 = vpack.c.b16 %v227, %v226
    %v235 = vpack.c.b16 %v229, %v228
    %v236 = vpack.c.b16 %v231, %v230
    %v237 = vpack.c.b16 %v233, %v232
    %v243 = vsel %vm143, %v217, 0
    %245 = vmatpush.bf16.msra.mxu0 0
    %246 = vmatpush.bf16.msra.mxu0 0
    %247 = vmatpush.bf16.msra.mxu0 0
    %248 = vmatpush.bf16.msra.mxu0 0
    %249 = vmatpush.bf16.msra.mxu0 %v237
    %250 = vmatpush.bf16.msra.mxu0 %v236
    %251 = vmatpush.bf16.msra.mxu0 %v235
    %252 = vmatpush.bf16.msra.mxu0 %v234
    %253 = vmatmul.bf16.gmra.mxu0 %v243
    %v254 = vpop.f32.mrf.mxu0
    %v255 = vadd.f32 0.0, %v254
    %v256 = vpop.f32.mrf.mxu0
    %v257 = vadd.f32 0.0, %v256
    %258 = vdwg.mxu0
    %v259 = vadd.f32 %v198, %v255
    %v260 = vadd.f32 %v200, %v257
    %261 = vmatpush.bf16.msra.mxu0 0
    %262 = vmatpush.bf16.msra.mxu0 0
    %263 = vmatpush.bf16.msra.mxu0 0
    %264 = vmatpush.bf16.msra.mxu0 0
    %265 = vmatpush.bf16.msra.mxu0 %v138
    %266 = vmatpush.bf16.msra.mxu0 %v137
    %267 = vmatpush.bf16.msra.mxu0 %v136
    %268 = vmatpush.bf16.msra.mxu0 %v135
    %269 = vmatmul.bf16.gmra.mxu0 %v243
    %v270 = vpop.f32.mrf.mxu0
    %v271 = vadd.f32 0.0, %v270
    %v272 = vpop.f32.mrf.mxu0
    %v273 = vadd.f32 0.0, %v272
    %274 = vdwg.mxu0
    %275 = vmatpush.bf16.msra.mxu0 0
    %276 = vmatpush.bf16.msra.mxu0 0
    %277 = vmatpush.bf16.msra.mxu0 0
    %278 = vmatpush.bf16.msra.mxu0 0
    %279 = vmatpush.bf16.msra.mxu0 %v180
    %280 = vmatpush.bf16.msra.mxu0 %v179
    %281 = vmatpush.bf16.msra.mxu0 %v178
    %282 = vmatpush.bf16.msra.mxu0 %v177
    %283 = vmatmul.bf16.gmra.mxu0 %v145
    %v284 = vpop.f32.mrf.mxu0
    %v285 = vadd.f32 %v271, %v284
    %v286 = vpop.f32.mrf.mxu0
    %v287 = vadd.f32 %v273, %v286
    %288 = vdwg.mxu0
    %v289 = vpack.c.bf16 %v99, %v99
    %v292 = vrot.slane %v118, 1
    %v293 = vrot.slane %v289, 1
    %v294 = vsel %vm214, %v292, %v293
    %v296 = vsel %vm143, %v294, 0
    %298 = vmatpush.bf16.msra.mxu0 0
    %299 = vmatpush.bf16.msra.mxu0 0
    %300 = vmatpush.bf16.msra.mxu0 0
    %301 = vmatpush.bf16.msra.mxu0 0
    %302 = vmatpush.bf16.msra.mxu0 %v237
    %303 = vmatpush.bf16.msra.mxu0 %v236
    %304 = vmatpush.bf16.msra.mxu0 %v235
    %305 = vmatpush.bf16.msra.mxu0 %v234
    %306 = vmatmul.bf16.gmra.mxu0 %v296
    %v307 = vpop.f32.mrf.mxu0
    %v308 = vadd.f32 0.0, %v307
    %v309 = vpop.f32.mrf.mxu0
    %v310 = vadd.f32 0.0, %v309
    %311 = vdwg.mxu0
    %v312 = vadd.f32 %v285, %v308
    %v313 = vadd.f32 %v287, %v310
    %v314 = vld [vmem:[%s3] sm:$0x1]
    %v316 = vperm.slane %v314, 0
    %v318 = vadd.f32 %v259, %v316
    %v319 = vadd.f32 %v260, %v316
    %v320 = vmul.f32 %v318, 0.009994507
    %v321 = vmul.f32 %v319, 0.009994507
    %v322 = vround.ne.pseudo %v320
    %v323 = vround.ne.pseudo %v321
    %v324 = vmax.f32 %v322, -128.0
    %v325 = vmax.f32 %v323, -128.0
    %v326 = vmin.f32 %v324, 127.0
    %v327 = vmin.f32 %v325, 127.0
    %v328 = vadd.f32 %v312, %v316
    %v329 = vadd.f32 %v313, %v316
    %v330 = vmul.f32 %v328, 0.009994507
    %v331 = vmul.f32 %v329, 0.009994507
    %v332 = vround.ne.pseudo %v330
    %v333 = vround.ne.pseudo %v331
    %v334 = vmax.f32 %v332, -128.0
    %v335 = vmax.f32 %v333, -128.0
    %v336 = vmin.f32 %v334, 127.0
    %v337 = vmin.f32 %v335, 127.0
    %338 = vst [vmem:[#allocation2] sm:$0x3] 0.0
    %339 = vst [vmem:[#allocation2 + $0x2] sm:$0xff] %v336
    %340 = vst [vmem:[#allocation2 + $0xa] sm:$0xff] %v337
    %v341 = vld [vmem:[#allocation2] sm:$0xff]
    %v342 = vld [vmem:[#allocation2 + $0x8] sm:$0xff]
    %v343 = vld [vmem:[%s4] sm:$0xf]
    %v344 = vld [vmem:[%s4 + $0x4] sm:$0xf]
    %v345 = vld [vmem:[%s4 + $0x8] sm:$0xf]
    %v346 = vld [vmem:[%s4 + $0xc] sm:$0xf]
    %v347 = vld [vmem:[%s4 + $0x10] sm:$0xf]
    %v348 = vld [vmem:[%s4 + $0x14] sm:$0xf]
    %v349 = vld [vmem:[%s4 + $0x18] sm:$0xf]
    %v350 = vld [vmem:[%s4 + $0x1c] sm:$0xf]
    %v351 = vld [vmem:[%s4 + $0x20] sm:$0xf]
    %v352 = vld [vmem:[%s4 + $0x24] sm:$0xf]
    %v353 = vld [vmem:[%s4 + $0x28] sm:$0xf]
    %v354 = vld [vmem:[%s4 + $0x2c] sm:$0xf]
    %v355 = vld [vmem:[%s4 + $0x30] sm:$0xf]
    %v356 = vld [vmem:[%s4 + $0x34] sm:$0xf]
    %v357 = vld [vmem:[%s4 + $0x38] sm:$0xf]
    %v358 = vld [vmem:[%s4 + $0x3c] sm:$0xf]
    %v359 = vpack.c.bf16 %v342, %v341
    %s360 = scalar_lea.vmem %s4, 64
    %v361 = vld [vmem:[%s360] sm:$0xf]
    %v362 = vld [vmem:[%s360 + $0x4] sm:$0xf]
    %v363 = vld [vmem:[%s360 + $0x8] sm:$0xf]
    %v364 = vld [vmem:[%s360 + $0xc] sm:$0xf]
    %v365 = vld [vmem:[%s360 + $0x10] sm:$0xf]
    %v366 = vld [vmem:[%s360 + $0x14] sm:$0xf]
    %v367 = vld [vmem:[%s360 + $0x18] sm:$0xf]
    %v368 = vld [vmem:[%s360 + $0x1c] sm:$0xf]
    %v369 = vld [vmem:[%s360 + $0x20] sm:$0xf]
    %v370 = vld [vmem:[%s360 + $0x24] sm:$0xf]
    %v371 = vld [vmem:[%s360 + $0x28] sm:$0xf]
    %v372 = vld [vmem:[%s360 + $0x2c] sm:$0xf]
    %v373 = vld [vmem:[%s360 + $0x30] sm:$0xf]
    %v374 = vld [vmem:[%s360 + $0x34] sm:$0xf]
    %v375 = vld [vmem:[%s360 + $0x38] sm:$0xf]
    %v376 = vld [vmem:[%s360 + $0x3c] sm:$0xf]
    %v377 = vpack.c.bf16 %v327, %v326
    %v394 = vunpack.c.l.b16 %v361
    %v395 = vunpack.c.l.b16 %v362
    %v396 = vunpack.c.l.b16 %v363
    %v397 = vunpack.c.l.b16 %v364
    %v398 = vunpack.c.l.b16 %v365
    %v399 = vunpack.c.l.b16 %v366
    %v400 = vunpack.c.l.b16 %v367
    %v401 = vunpack.c.l.b16 %v368
    %v402 = vunpack.c.l.b16 %v369
    %v403 = vunpack.c.l.b16 %v370
    %v404 = vunpack.c.l.b16 %v371
    %v405 = vunpack.c.l.b16 %v372
    %v406 = vunpack.c.l.b16 %v373
    %v407 = vunpack.c.l.b16 %v374
    %v408 = vunpack.c.l.b16 %v375
    %v409 = vunpack.c.l.b16 %v376
    %v410 = vpack.c.b16 %v395, %v394
    %v411 = vpack.c.b16 %v397, %v396
    %v412 = vpack.c.b16 %v399, %v398
    %v413 = vpack.c.b16 %v401, %v400
    %v414 = vpack.c.b16 %v403, %v402
    %v415 = vpack.c.b16 %v405, %v404
    %v416 = vpack.c.b16 %v407, %v406
    %v417 = vpack.c.b16 %v409, %v408
    %426 = vmatpush.bf16.msra.mxu0 %v417
    %427 = vmatpush.bf16.msra.mxu0 %v416
    %428 = vmatpush.bf16.msra.mxu0 %v415
    %429 = vmatpush.bf16.msra.mxu0 %v414
    %430 = vmatpush.bf16.msra.mxu0 %v413
    %431 = vmatpush.bf16.msra.mxu0 %v412
    %432 = vmatpush.bf16.msra.mxu0 %v411
    %433 = vmatpush.bf16.msra.mxu0 %v410
    %434 = vmatmul.bf16.gmra.mxu0 %v377
    %v435 = vpop.f32.mrf.mxu0
    %v436 = vadd.f32 0.0, %v435
    %v437 = vpop.f32.mrf.mxu0
    %v438 = vadd.f32 0.0, %v437
    %439 = vdwg.mxu0
    %v456 = vunpack.c.l.b16 %v343
    %v457 = vunpack.c.l.b16 %v344
    %v458 = vunpack.c.l.b16 %v345
    %v459 = vunpack.c.l.b16 %v346
    %v460 = vunpack.c.l.b16 %v347
    %v461 = vunpack.c.l.b16 %v348
    %v462 = vunpack.c.l.b16 %v349
    %v463 = vunpack.c.l.b16 %v350
    %v464 = vunpack.c.l.b16 %v351
    %v465 = vunpack.c.l.b16 %v352
    %v466 = vunpack.c.l.b16 %v353
    %v467 = vunpack.c.l.b16 %v354
    %v468 = vunpack.c.l.b16 %v355
    %v469 = vunpack.c.l.b16 %v356
    %v470 = vunpack.c.l.b16 %v357
    %v471 = vunpack.c.l.b16 %v358
    %v472 = vpack.c.b16 %v457, %v456
    %v473 = vpack.c.b16 %v459, %v458
    %v474 = vpack.c.b16 %v461, %v460
    %v475 = vpack.c.b16 %v463, %v462
    %v476 = vpack.c.b16 %v465, %v464
    %v477 = vpack.c.b16 %v467, %v466
    %v478 = vpack.c.b16 %v469, %v468
    %v479 = vpack.c.b16 %v471, %v470
    %488 = vmatpush.bf16.msra.mxu0 %v479
    %489 = vmatpush.bf16.msra.mxu0 %v478
    %490 = vmatpush.bf16.msra.mxu0 %v477
    %491 = vmatpush.bf16.msra.mxu0 %v476
    %492 = vmatpush.bf16.msra.mxu0 %v475
    %493 = vmatpush.bf16.msra.mxu0 %v474
    %494 = vmatpush.bf16.msra.mxu0 %v473
    %495 = vmatpush.bf16.msra.mxu0 %v472
    %496 = vmatmul.bf16.gmra.mxu0 %v359
    %v497 = vpop.f32.mrf.mxu0
    %v498 = vadd.f32 %v436, %v497
    %v499 = vpop.f32.mrf.mxu0
    %v500 = vadd.f32 %v438, %v499
    %501 = vdwg.mxu0
    %v502 = vld [vmem:[#allocation2 + $0x2] sm:$0xff]
    %v503 = vld [vmem:[#allocation2 + $0xa] sm:$0xff]
    %s504 = scalar_lea.vmem %s4, 128
    %v505 = vld [vmem:[%s504] sm:$0xf]
    %v506 = vld [vmem:[%s504 + $0x4] sm:$0xf]
    %v507 = vld [vmem:[%s504 + $0x8] sm:$0xf]
    %v508 = vld [vmem:[%s504 + $0xc] sm:$0xf]
    %v509 = vld [vmem:[%s504 + $0x10] sm:$0xf]
    %v510 = vld [vmem:[%s504 + $0x14] sm:$0xf]
    %v511 = vld [vmem:[%s504 + $0x18] sm:$0xf]
    %v512 = vld [vmem:[%s504 + $0x1c] sm:$0xf]
    %v513 = vld [vmem:[%s504 + $0x20] sm:$0xf]
    %v514 = vld [vmem:[%s504 + $0x24] sm:$0xf]
    %v515 = vld [vmem:[%s504 + $0x28] sm:$0xf]
    %v516 = vld [vmem:[%s504 + $0x2c] sm:$0xf]
    %v517 = vld [vmem:[%s504 + $0x30] sm:$0xf]
    %v518 = vld [vmem:[%s504 + $0x34] sm:$0xf]
    %v519 = vld [vmem:[%s504 + $0x38] sm:$0xf]
    %v520 = vld [vmem:[%s504 + $0x3c] sm:$0xf]
    %v521 = vpack.c.bf16 %v503, %v502
    %v538 = vunpack.c.l.b16 %v505
    %v539 = vunpack.c.l.b16 %v506
    %v540 = vunpack.c.l.b16 %v507
    %v541 = vunpack.c.l.b16 %v508
    %v542 = vunpack.c.l.b16 %v509
    %v543 = vunpack.c.l.b16 %v510
    %v544 = vunpack.c.l.b16 %v511
    %v545 = vunpack.c.l.b16 %v512
    %v546 = vunpack.c.l.b16 %v513
    %v547 = vunpack.c.l.b16 %v514
    %v548 = vunpack.c.l.b16 %v515
    %v549 = vunpack.c.l.b16 %v516
    %v550 = vunpack.c.l.b16 %v517
    %v551 = vunpack.c.l.b16 %v518
    %v552 = vunpack.c.l.b16 %v519
    %v553 = vunpack.c.l.b16 %v520
    %v554 = vpack.c.b16 %v539, %v538
    %v555 = vpack.c.b16 %v541, %v540
    %v556 = vpack.c.b16 %v543, %v542
    %v557 = vpack.c.b16 %v545, %v544
    %v558 = vpack.c.b16 %v547, %v546
    %v559 = vpack.c.b16 %v549, %v548
    %v560 = vpack.c.b16 %v551, %v550
    %v561 = vpack.c.b16 %v553, %v552
    %570 = vmatpush.bf16.msra.mxu0 %v561
    %571 = vmatpush.bf16.msra.mxu0 %v560
    %572 = vmatpush.bf16.msra.mxu0 %v559
    %573 = vmatpush.bf16.msra.mxu0 %v558
    %574 = vmatpush.bf16.msra.mxu0 %v557
    %575 = vmatpush.bf16.msra.mxu0 %v556
    %576 = vmatpush.bf16.msra.mxu0 %v555
    %577 = vmatpush.bf16.msra.mxu0 %v554
    %578 = vmatmul.bf16.gmra.mxu0 %v521
    %v579 = vpop.f32.mrf.mxu0
    %v580 = vadd.f32 0.0, %v579
    %v581 = vpop.f32.mrf.mxu0
    %v582 = vadd.f32 0.0, %v581
    %583 = vdwg.mxu0
    %v584 = vadd.f32 %v498, %v580
    %v585 = vadd.f32 %v500, %v582
    %v586 = vld [vmem:[%s5] sm:$0x1]
    %v588 = vperm.slane %v586, 0
    %v590 = vadd.f32 %v584, %v588
    %v591 = vadd.f32 %v585, %v588
    %v592 = vmul.f32 %v590, 0.020004272
    %v593 = vmul.f32 %v591, 0.020004272
    %v594 = vround.ne.pseudo %v592
    %v595 = vround.ne.pseudo %v593
    %v596 = vmax.f32 %v594, -128.0
    %v597 = vmax.f32 %v595, -128.0
    %v598 = vmin.f32 %v596, 127.0
    %v599 = vmin.f32 %v597, 127.0
    %v600 = vld [vmem:[%s6] sm:$0xf]
    %v601 = vld [vmem:[%s6 + $0x4] sm:$0xf]
    %v602 = vld [vmem:[%s6 + $0x8] sm:$0xf]
    %v603 = vld [vmem:[%s6 + $0xc] sm:$0xf]
    %v604 = vld [vmem:[%s6 + $0x10] sm:$0xf]
    %v605 = vld [vmem:[%s6 + $0x14] sm:$0xf]
    %v606 = vld [vmem:[%s6 + $0x18] sm:$0xf]
    %v607 = vld [vmem:[%s6 + $0x1c] sm:$0xf]
    %v608 = vpack.c.bf16 %v598, %v598
    %s609 = scalar_lea.vmem %s6, 32
    %v610 = vld [vmem:[%s609] sm:$0xf]
    %v611 = vld [vmem:[%s609 + $0x4] sm:$0xf]
    %v612 = vld [vmem:[%s609 + $0x8] sm:$0xf]
    %v613 = vld [vmem:[%s609 + $0xc] sm:$0xf]
    %v614 = vld [vmem:[%s609 + $0x10] sm:$0xf]
    %v615 = vld [vmem:[%s609 + $0x14] sm:$0xf]
    %v616 = vld [vmem:[%s609 + $0x18] sm:$0xf]
    %v617 = vld [vmem:[%s609 + $0x1c] sm:$0xf]
    %v619 = vrot.slane %v608, 1
    %v628 = vunpack.c.l.b16 %v610
    %v629 = vunpack.c.l.b16 %v611
    %v630 = vunpack.c.l.b16 %v612
    %v631 = vunpack.c.l.b16 %v613
    %v632 = vunpack.c.l.b16 %v614
    %v633 = vunpack.c.l.b16 %v615
    %v634 = vunpack.c.l.b16 %v616
    %v635 = vunpack.c.l.b16 %v617
    %v636 = vpack.c.b16 %v629, %v628
    %v637 = vpack.c.b16 %v631, %v630
    %v638 = vpack.c.b16 %v633, %v632
    %v639 = vpack.c.b16 %v635, %v634
    %v645 = vsel %vm143, %v619, 0
    %647 = vmatpush.bf16.msra.mxu0 0
    %648 = vmatpush.bf16.msra.mxu0 0
    %649 = vmatpush.bf16.msra.mxu0 0
    %650 = vmatpush.bf16.msra.mxu0 0
    %651 = vmatpush.bf16.msra.mxu0 %v639
    %652 = vmatpush.bf16.msra.mxu0 %v638
    %653 = vmatpush.bf16.msra.mxu0 %v637
    %654 = vmatpush.bf16.msra.mxu0 %v636
    %655 = vmatmul.bf16.gmra.mxu0 %v645
    %v656 = vpop.f32.mrf.mxu0
    %v657 = vadd.f32 0.0, %v656
    %v658 = vpop.f32.mrf.mxu0
    %659 = vdwg.mxu0
    %v668 = vunpack.c.l.b16 %v600
    %v669 = vunpack.c.l.b16 %v601
    %v670 = vunpack.c.l.b16 %v602
    %v671 = vunpack.c.l.b16 %v603
    %v672 = vunpack.c.l.b16 %v604
    %v673 = vunpack.c.l.b16 %v605
    %v674 = vunpack.c.l.b16 %v606
    %v675 = vunpack.c.l.b16 %v607
    %v676 = vpack.c.b16 %v669, %v668
    %v677 = vpack.c.b16 %v671, %v670
    %v678 = vpack.c.b16 %v673, %v672
    %v679 = vpack.c.b16 %v675, %v674
    %v685 = vsel %vm143, %v608, 0
    %687 = vmatpush.bf16.msra.mxu0 0
    %688 = vmatpush.bf16.msra.mxu0 0
    %689 = vmatpush.bf16.msra.mxu0 0
    %690 = vmatpush.bf16.msra.mxu0 0
    %691 = vmatpush.bf16.msra.mxu0 %v679
    %692 = vmatpush.bf16.msra.mxu0 %v678
    %693 = vmatpush.bf16.msra.mxu0 %v677
    %694 = vmatpush.bf16.msra.mxu0 %v676
    %695 = vmatmul.bf16.gmra.mxu0 %v685
    %v696 = vpop.f32.mrf.mxu0
    %v697 = vadd.f32 %v657, %v696
    %v698 = vpop.f32.mrf.mxu0
    %699 = vdwg.mxu0
    %s700 = scalar_lea.vmem %s6, 64
    %v701 = vld [vmem:[%s700] sm:$0xf]
    %v702 = vld [vmem:[%s700 + $0x4] sm:$0xf]
    %v703 = vld [vmem:[%s700 + $0x8] sm:$0xf]
    %v704 = vld [vmem:[%s700 + $0xc] sm:$0xf]
    %v705 = vld [vmem:[%s700 + $0x10] sm:$0xf]
    %v706 = vld [vmem:[%s700 + $0x14] sm:$0xf]
    %v707 = vld [vmem:[%s700 + $0x18] sm:$0xf]
    %v708 = vld [vmem:[%s700 + $0x1c] sm:$0xf]
    %v709 = vrot.slane %v608, 2
    %v718 = vunpack.c.l.b16 %v701
    %v719 = vunpack.c.l.b16 %v702
    %v720 = vunpack.c.l.b16 %v703
    %v721 = vunpack.c.l.b16 %v704
    %v722 = vunpack.c.l.b16 %v705
    %v723 = vunpack.c.l.b16 %v706
    %v724 = vunpack.c.l.b16 %v707
    %v725 = vunpack.c.l.b16 %v708
    %v726 = vpack.c.b16 %v719, %v718
    %v727 = vpack.c.b16 %v721, %v720
    %v728 = vpack.c.b16 %v723, %v722
    %v729 = vpack.c.b16 %v725, %v724
    %v735 = vsel %vm143, %v709, 0
    %737 = vmatpush.bf16.msra.mxu0 0
    %738 = vmatpush.bf16.msra.mxu0 0
    %739 = vmatpush.bf16.msra.mxu0 0
    %740 = vmatpush.bf16.msra.mxu0 0
    %741 = vmatpush.bf16.msra.mxu0 %v729
    %742 = vmatpush.bf16.msra.mxu0 %v728
    %743 = vmatpush.bf16.msra.mxu0 %v727
    %744 = vmatpush.bf16.msra.mxu0 %v726
    %745 = vmatmul.bf16.gmra.mxu0 %v735
    %v746 = vpop.f32.mrf.mxu0
    %v747 = vadd.f32 0.0, %v746
    %v748 = vpop.f32.mrf.mxu0
    %749 = vdwg.mxu0
    %v750 = vadd.f32 %v697, %v747
    %s751 = scalar_lea.vmem %s6, 96
    %v752 = vld [vmem:[%s751] sm:$0xf]
    %v753 = vld [vmem:[%s751 + $0x4] sm:$0xf]
    %v754 = vld [vmem:[%s751 + $0x8] sm:$0xf]
    %v755 = vld [vmem:[%s751 + $0xc] sm:$0xf]
    %v756 = vld [vmem:[%s751 + $0x10] sm:$0xf]
    %v757 = vld [vmem:[%s751 + $0x14] sm:$0xf]
    %v758 = vld [vmem:[%s751 + $0x18] sm:$0xf]
    %v759 = vld [vmem:[%s751 + $0x1c] sm:$0xf]
    %v760 = vrot.slane %v608, 3
    %v769 = vunpack.c.l.b16 %v752
    %v770 = vunpack.c.l.b16 %v753
    %v771 = vunpack.c.l.b16 %v754
    %v772 = vunpack.c.l.b16 %v755
    %v773 = vunpack.c.l.b16 %v756
    %v774 = vunpack.c.l.b16 %v757
    %v775 = vunpack.c.l.b16 %v758
    %v776 = vunpack.c.l.b16 %v759
    %v777 = vpack.c.b16 %v770, %v769
    %v778 = vpack.c.b16 %v772, %v771
    %v779 = vpack.c.b16 %v774, %v773
    %v780 = vpack.c.b16 %v776, %v775
    %v786 = vsel %vm143, %v760, 0
    %788 = vmatpush.bf16.msra.mxu0 0
    %789 = vmatpush.bf16.msra.mxu0 0
    %790 = vmatpush.bf16.msra.mxu0 0
    %791 = vmatpush.bf16.msra.mxu0 0
    %792 = vmatpush.bf16.msra.mxu0 %v780
    %793 = vmatpush.bf16.msra.mxu0 %v779
    %794 = vmatpush.bf16.msra.mxu0 %v778
    %795 = vmatpush.bf16.msra.mxu0 %v777
    %796 = vmatmul.bf16.gmra.mxu0 %v786
    %v797 = vpop.f32.mrf.mxu0
    %v798 = vadd.f32 0.0, %v797
    %v799 = vpop.f32.mrf.mxu0
    %800 = vdwg.mxu0
    %v801 = vadd.f32 %v750, %v798
    %s802 = scalar_lea.vmem %s6, 128
    %v803 = vld [vmem:[%s802] sm:$0xf]
    %v804 = vld [vmem:[%s802 + $0x4] sm:$0xf]
    %v805 = vld [vmem:[%s802 + $0x8] sm:$0xf]
    %v806 = vld [vmem:[%s802 + $0xc] sm:$0xf]
    %v807 = vld [vmem:[%s802 + $0x10] sm:$0xf]
    %v808 = vld [vmem:[%s802 + $0x14] sm:$0xf]
    %v809 = vld [vmem:[%s802 + $0x18] sm:$0xf]
    %v810 = vld [vmem:[%s802 + $0x1c] sm:$0xf]
    %v811 = vpack.c.bf16 %v599, %v599
    %v820 = vunpack.c.l.b16 %v803
    %v821 = vunpack.c.l.b16 %v804
    %v822 = vunpack.c.l.b16 %v805
    %v823 = vunpack.c.l.b16 %v806
    %v824 = vunpack.c.l.b16 %v807
    %v825 = vunpack.c.l.b16 %v808
    %v826 = vunpack.c.l.b16 %v809
    %v827 = vunpack.c.l.b16 %v810
    %v828 = vpack.c.b16 %v821, %v820
    %v829 = vpack.c.b16 %v823, %v822
    %v830 = vpack.c.b16 %v825, %v824
    %v831 = vpack.c.b16 %v827, %v826
    %v837 = vsel %vm143, %v811, 0
    %839 = vmatpush.bf16.msra.mxu0 0
    %840 = vmatpush.bf16.msra.mxu0 0
    %841 = vmatpush.bf16.msra.mxu0 0
    %842 = vmatpush.bf16.msra.mxu0 0
    %843 = vmatpush.bf16.msra.mxu0 %v831
    %844 = vmatpush.bf16.msra.mxu0 %v830
    %845 = vmatpush.bf16.msra.mxu0 %v829
    %846 = vmatpush.bf16.msra.mxu0 %v828
    %847 = vmatmul.bf16.gmra.mxu0 %v837
    %v848 = vpop.f32.mrf.mxu0
    %v849 = vadd.f32 0.0, %v848
    %v850 = vpop.f32.mrf.mxu0
    %851 = vdwg.mxu0
    %v852 = vadd.f32 %v801, %v849
    %s853 = scalar_lea.vmem %s6, 160
    %v854 = vld [vmem:[%s853] sm:$0xf]
    %v855 = vld [vmem:[%s853 + $0x4] sm:$0xf]
    %v856 = vld [vmem:[%s853 + $0x8] sm:$0xf]
    %v857 = vld [vmem:[%s853 + $0xc] sm:$0xf]
    %v858 = vld [vmem:[%s853 + $0x10] sm:$0xf]
    %v859 = vld [vmem:[%s853 + $0x14] sm:$0xf]
    %v860 = vld [vmem:[%s853 + $0x18] sm:$0xf]
    %v861 = vld [vmem:[%s853 + $0x1c] sm:$0xf]
    %v863 = vrot.slane %v811, 1
    %v872 = vunpack.c.l.b16 %v854
    %v873 = vunpack.c.l.b16 %v855
    %v874 = vunpack.c.l.b16 %v856
    %v875 = vunpack.c.l.b16 %v857
    %v876 = vunpack.c.l.b16 %v858
    %v877 = vunpack.c.l.b16 %v859
    %v878 = vunpack.c.l.b16 %v860
    %v879 = vunpack.c.l.b16 %v861
    %v880 = vpack.c.b16 %v873, %v872
    %v881 = vpack.c.b16 %v875, %v874
    %v882 = vpack.c.b16 %v877, %v876
    %v883 = vpack.c.b16 %v879, %v878
    %v889 = vsel %vm143, %v863, 0
    %891 = vmatpush.bf16.msra.mxu0 0
    %892 = vmatpush.bf16.msra.mxu0 0
    %893 = vmatpush.bf16.msra.mxu0 0
    %894 = vmatpush.bf16.msra.mxu0 0
    %895 = vmatpush.bf16.msra.mxu0 %v883
    %896 = vmatpush.bf16.msra.mxu0 %v882
    %897 = vmatpush.bf16.msra.mxu0 %v881
    %898 = vmatpush.bf16.msra.mxu0 %v880
    %899 = vmatmul.bf16.gmra.mxu0 %v889
    %v900 = vpop.f32.mrf.mxu0
    %v901 = vadd.f32 0.0, %v900
    %v902 = vpop.f32.mrf.mxu0
    %903 = vdwg.mxu0
    %v904 = vadd.f32 %v852, %v901
    %s905 = scalar_lea.vmem %s6, 192
    %v906 = vld [vmem:[%s905] sm:$0xf]
    %v907 = vld [vmem:[%s905 + $0x4] sm:$0xf]
    %v908 = vld [vmem:[%s905 + $0x8] sm:$0xf]
    %v909 = vld [vmem:[%s905 + $0xc] sm:$0xf]
    %v910 = vld [vmem:[%s905 + $0x10] sm:$0xf]
    %v911 = vld [vmem:[%s905 + $0x14] sm:$0xf]
    %v912 = vld [vmem:[%s905 + $0x18] sm:$0xf]
    %v913 = vld [vmem:[%s905 + $0x1c] sm:$0xf]
    %v914 = vrot.slane %v811, 2
    %v923 = vunpack.c.l.b16 %v906
    %v924 = vunpack.c.l.b16 %v907
    %v925 = vunpack.c.l.b16 %v908
    %v926 = vunpack.c.l.b16 %v909
    %v927 = vunpack.c.l.b16 %v910
    %v928 = vunpack.c.l.b16 %v911
    %v929 = vunpack.c.l.b16 %v912
    %v930 = vunpack.c.l.b16 %v913
    %v931 = vpack.c.b16 %v924, %v923
    %v932 = vpack.c.b16 %v926, %v925
    %v933 = vpack.c.b16 %v928, %v927
    %v934 = vpack.c.b16 %v930, %v929
    %v940 = vsel %vm143, %v914, 0
    %942 = vmatpush.bf16.msra.mxu0 0
    %943 = vmatpush.bf16.msra.mxu0 0
    %944 = vmatpush.bf16.msra.mxu0 0
    %945 = vmatpush.bf16.msra.mxu0 0
    %946 = vmatpush.bf16.msra.mxu0 %v934
    %947 = vmatpush.bf16.msra.mxu0 %v933
    %948 = vmatpush.bf16.msra.mxu0 %v932
    %949 = vmatpush.bf16.msra.mxu0 %v931
    %950 = vmatmul.bf16.gmra.mxu0 %v940
    %v951 = vpop.f32.mrf.mxu0
    %v952 = vadd.f32 0.0, %v951
    %v953 = vpop.f32.mrf.mxu0
    %954 = vdwg.mxu0
    %v955 = vadd.f32 %v904, %v952
    %s956 = scalar_lea.vmem %s6, 224
    %v957 = vld [vmem:[%s956] sm:$0xf]
    %v958 = vld [vmem:[%s956 + $0x4] sm:$0xf]
    %v959 = vld [vmem:[%s956 + $0x8] sm:$0xf]
    %v960 = vld [vmem:[%s956 + $0xc] sm:$0xf]
    %v961 = vld [vmem:[%s956 + $0x10] sm:$0xf]
    %v962 = vld [vmem:[%s956 + $0x14] sm:$0xf]
    %v963 = vld [vmem:[%s956 + $0x18] sm:$0xf]
    %v964 = vld [vmem:[%s956 + $0x1c] sm:$0xf]
    %v965 = vrot.slane %v811, 3
    %v974 = vunpack.c.l.b16 %v957
    %v975 = vunpack.c.l.b16 %v958
    %v976 = vunpack.c.l.b16 %v959
    %v977 = vunpack.c.l.b16 %v960
    %v978 = vunpack.c.l.b16 %v961
    %v979 = vunpack.c.l.b16 %v962
    %v980 = vunpack.c.l.b16 %v963
    %v981 = vunpack.c.l.b16 %v964
    %v982 = vpack.c.b16 %v975, %v974
    %v983 = vpack.c.b16 %v977, %v976
    %v984 = vpack.c.b16 %v979, %v978
    %v985 = vpack.c.b16 %v981, %v980
    %v991 = vsel %vm143, %v965, 0
    %993 = vmatpush.bf16.msra.mxu0 0
    %994 = vmatpush.bf16.msra.mxu0 0
    %995 = vmatpush.bf16.msra.mxu0 0
    %996 = vmatpush.bf16.msra.mxu0 0
    %997 = vmatpush.bf16.msra.mxu0 %v985
    %998 = vmatpush.bf16.msra.mxu0 %v984
    %999 = vmatpush.bf16.msra.mxu0 %v983
    %1000 = vmatpush.bf16.msra.mxu0 %v982
    %1001 = vmatmul.bf16.gmra.mxu0 %v991
    %v1002 = vpop.f32.mrf.mxu0
    %v1003 = vadd.f32 0.0, %v1002
    %v1004 = vpop.f32.mrf.mxu0
    %1005 = vdwg.mxu0
    %v1006 = vadd.f32 %v955, %v1003
    %v1007 = vld [vmem:[%s7] sm:$0x1]
    %v1009 = vperm.slane %v1007, 0
    %v1011 = vadd.f32 %v1006, %v1009
    %1012 = vst [vmem:[#allocation8] sm:$0x3] %v1011
    // Predicated region
    $region42: #{tpu_custom_call.1} parent=1 // pred_check
      _
    $region43: #{tpu_custom_call.1} parent=1 // pred_check_branch
      %1014 = sbr.rel (0) target = $region45
    $region44: #{tpu_custom_call.1} parent=1 // pred_region
      %1016 = vsyncadd [#allocation5], 0
      %s1018 = sshll.u32 [#allocation8], 4
      %s1019 = int_to_ptr.vmem [resolvable:$true] %s1018
      %s1020 = sshll.u32 %s8, 4
      %s1021 = int_to_ptr.hbm [resolvable:$true] %s1020
      %1023 = dma.vmem_to_hbm [thread:$0]  %s1019, 32, %s1021, [#allocation5]
    $region45: #{tpu_custom_call.1} parent=1 // pred_fallthru
      _
    // Predicated region
    $region46: #{tpu_custom_call.1} parent=1 // pred_check
      _
    $region47: #{tpu_custom_call.1} parent=1 // pred_check_branch
      %1025 = sbr.rel (0) target = $region49
    $region48: #{tpu_custom_call.1} parent=1 // pred_region
      %1027 = dma.done [#allocation5], 32
    $region49: #{tpu_custom_call.1} parent=1 // pred_fallthru
      _
    %1028 = vsyncpa [#allocation4], 1
    %1029 = vsyncpa [#allocation7], 1
    %1030 = vsyncpa [#allocation5], 1

</llo_original>
